<compile_context>
chip_gen: v6e
topology: v6e:2x2x1
jax: 0.10.0
libtpu: 0.0.40
codegen_flags: <defaults>
</compile_context>

<pallas_src>
import functools

import numpy as np
import jax
import jax.numpy as jnp
from jax import lax
from jax.experimental import pallas as pl
from jax.experimental.pallas import tpu as pltpu


def _target_inv_normalizer(n, temperature):
    # sum_k w[k] with w[k] = exp(-T*(N-1-k)) for k >= 1 and w[0] = 0.
    # Data independent -> computed once at trace time (review item: hoist the
    # per-row normalization). N == 1 gives 0/0, matching the reference's NaN.
    if n <= 1:
        return float("nan")
    k = np.arange(1, n, dtype=np.float64)
    denom = np.exp(-float(temperature) * (n - 1 - k)).sum()
    return float(1.0 / denom)


def _ranking_ce_kernel(scores_ref, rel_ref, loss_ref, *, temperature, total_rows,
                       inv_denom):
    """Blocks: scores/rel (TB, N) in VMEM, loss (TB, 1) out. Fully batched."""
    TB, N = scores_ref.shape
    temp = jnp.float32(temperature)

    # Cast the whole block once (no per-row casts).
    s = scores_ref[...].astype(jnp.float32)                       # (TB, N)
    r = rel_ref[...].astype(jnp.float32)                          # (TB, N)

    # Lane index k == original item index.
    lane_k = lax.broadcasted_iota(jnp.int32, (1, N), 1)           # (1, N)
    lane_kf = lane_k.astype(jnp.float32)

    # Normalized target weight for original index k:
    #   w[k] = exp(-T*(N-1-k)),  w[0] = 0,  w_norm = w * inv_denom  (sums to 1)
    w_row = jnp.exp(temp * (lane_kf - jnp.float32(N - 1)))        # (1, N)
    w_row = jnp.where(lane_k == 0, 0.0, w_row) * jnp.float32(inv_denom)

    # --- per-row log-sum-exp of the scores (batched: 2 lane reduces total) ---
    m = jnp.max(s, axis=1, keepdims=True)                         # (TB, 1)
    lse = m + jnp.log(jnp.sum(jnp.exp(s - m), axis=1, keepdims=True))

    # --- stable ascending rank q[b,k] of every element (lane-dense) ----------
    #   q[b,k] = #{j : r[b,j] < r[b,k]} + #{j < k : r[b,j] == r[b,k]}
    q = jnp.zeros((TB, N), jnp.int32)
    for j in range(N):            # N is small & static -> deliberate unroll
        r_j = r[:, j:j + 1]                                       # (TB, 1)
        hit = (r_j < r) | ((r_j == r) & (lane_k > j))
        q = q + hit.astype(jnp.int32)

    # --- gather the score sitting at each element's sorted slot --------------
    #   s_gath[b,k] = s[b, q[b,k]]   (masked accumulate; no per-row onehot matrix)
    s_gath = jnp.zeros((TB, N), jnp.float32)
    for j in range(N):
        s_gath = s_gath + jnp.where(q == j, s[:, j:j + 1], 0.0)

    # --- soft-label cross entropy:  loss_b = lse_b - sum_k w_norm[k]*s[b,q[b,k]] --
    dot_row = jnp.sum(w_row * s_gath, axis=1, keepdims=True)      # (TB, 1)
    loss_rows = lse - dot_row                                     # (TB, 1)

    # Rows past the true batch (padding of the last grid block) contribute 0.
    row_id = lax.broadcasted_iota(jnp.int32, (TB, 1), 0) + pl.program_id(0) * TB
    loss_ref[...] = jnp.where(row_id < total_rows, loss_rows, 0.0)


def ranking_cross_entropy_loss(scores, relevance, temperature: float = 1.0,
                               block_rows=None):
    """scores, relevance: [B, N]. Returns scalar f32 loss (mean over batch)."""
    assert scores.shape == relevance.shape and scores.ndim == 2
    B, N = scores.shape

    if block_rows is None:
        # Biggest tile that keeps double-buffered inputs + temporaries well under
        # the scoped VMEM limit on every generation (incl. v7x's 64 MiB VMEM).
        block_rows = B if B <= 256 else 256
    block_rows = min(block_rows, max(B, 1))
    if block_rows < B and block_rows % 8 != 0:
        block_rows = max(8, block_rows - block_rows % 8)   # sublane tiling constraint

    num_blocks = pl.cdiv(B, block_rows)
    kernel = functools.partial(
        _ranking_ce_kernel,
        temperature=float(temperature),
        total_rows=B,
        inv_denom=_target_inv_normalizer(N, float(temperature)),
    )

    per_row = pl.pallas_call(
        kernel,
        out_shape=jax.ShapeDtypeStruct((B, 1), jnp.float32),
        grid=(num_blocks,),
        in_specs=[
            pl.BlockSpec((block_rows, N), lambda i: (i, 0)),
            pl.BlockSpec((block_rows, N), lambda i: (i, 0)),
        ],
        out_specs=pl.BlockSpec((block_rows, 1), lambda i: (i, 0)),
        compiler_params=pltpu.CompilerParams(
            dimension_semantics=("parallel",),   # batch blocks are independent
        ),
    )(scores, relevance)

    return jnp.sum(per_row[:, 0]) / jnp.float32(B)


def _reference(scores, relevance, temperature):
    # Pure-JAX reference mirroring the PyTorch module.
    N = relevance.shape[-1]
    p = jnp.argsort(relevance, axis=-1).astype(scores.dtype)
    ranks = jnp.float32(N - 1) - p
    ranks = jnp.where(p == 0, jnp.inf, ranks)
    target = jax.nn.softmax(-temperature * ranks, axis=-1)
    lsm = jax.nn.log_softmax(scores, axis=-1)
    return -jnp.mean(jnp.sum(target * lsm, axis=-1))


if __name__ == "__main__":
    key = jax.random.PRNGKey(0)
    k1, k2, k3, k4 = jax.random.split(key, 4)

    # Shapes matching the module's (batch, num_items) convention.
    B, N = 4, 16
    scores = jax.random.normal(k1, (B, N), dtype=jnp.float32)
    relevance = jax.random.uniform(k2, (B, N), dtype=jnp.float32)

    loss = ranking_cross_entropy_loss(scores, relevance, temperature=1.0)
    loss = jax.block_until_ready(loss)
    ref = _reference(scores, relevance, 1.0)
    assert bool(jnp.isfinite(loss)), loss
    assert jnp.allclose(loss, ref, rtol=1e-4, atol=1e-5), (loss, ref)

    # Second config exercising the batch grid (multiple blocks + padded tail block).
    B2, N2 = 20, 16
    scores2 = jax.random.normal(k3, (B2, N2), dtype=jnp.float32)
    relevance2 = jax.random.uniform(k4, (B2, N2), dtype=jnp.float32)
    loss2 = jax.block_until_ready(
        ranking_cross_entropy_loss(scores2, relevance2, temperature=0.7, block_rows=8))
    ref2 = _reference(scores2, relevance2, 0.7)
    assert jnp.allclose(loss2, ref2, rtol=1e-4, atol=1e-5), (loss2, ref2)

    print("KERNEL_OK")
</pallas_src>

<mosaic_0001>
module attributes {stable_mosaic.version = 11 : i64} {
  func.func @_ranking_ce_kernel(%arg0: i32, %arg1: memref<4x16xf32, #tpu.memory_space<vmem>>, %arg2: memref<4x16xf32, #tpu.memory_space<vmem>>, %arg3: memref<4x1xf32, #tpu.memory_space<vmem>>) attributes {dimension_semantics = [#tpu.dimension_semantics<parallel>], iteration_bounds = array<i64: 1>, scalar_prefetch = 0 : i64, scratch_operands = 0 : i64, tpu.core_type = #tpu.core_type<tc>, window_params = [{transform_indices = @transform_0, window_bounds = array<i64: 4, 16>}, {transform_indices = @transform_1, window_bounds = array<i64: 4, 16>}, {transform_indices = @transform_2, window_bounds = array<i64: 4, 1>}]} {
    %c0 = arith.constant 0 : index
    %c0_0 = arith.constant 0 : index
    %0 = vector.load %arg1[%c0, %c0_0] : memref<4x16xf32, #tpu.memory_space<vmem>>, vector<4x16xf32>
    %c0_1 = arith.constant 0 : index
    %c0_2 = arith.constant 0 : index
    %1 = vector.load %arg2[%c0_1, %c0_2] : memref<4x16xf32, #tpu.memory_space<vmem>>, vector<4x16xf32>
    %2 = tpu.iota {dimensions = array<i32: 1>} : vector<1x16xi32>
    %3 = arith.sitofp %2 : vector<1x16xi32> to vector<1x16xf32>
    %cst = arith.constant 1.500000e+01 : f32
    %4 = vector.broadcast %cst : f32 to vector<1x16xf32>
    %5 = arith.subf %3, %4 : vector<1x16xf32>
    %cst_3 = arith.constant 1.000000e+00 : f32
    %6 = vector.broadcast %cst_3 : f32 to vector<1x16xf32>
    %7 = arith.mulf %6, %5 : vector<1x16xf32>
    %8 = math.exp %7 : vector<1x16xf32>
    %c0_i32 = arith.constant 0 : i32
    %9 = vector.broadcast %c0_i32 : i32 to vector<1x16xi32>
    %10 = arith.cmpi eq, %2, %9 : vector<1x16xi32>
    %cst_4 = arith.constant 0.000000e+00 : f32
    %11 = vector.broadcast %cst_4 : f32 to vector<1x16xf32>
    %12 = arith.select %10, %11, %8 : vector<1x16xi1>, vector<1x16xf32>
    %cst_5 = arith.constant 0.632120728 : f32
    %13 = vector.broadcast %cst_5 : f32 to vector<1x16xf32>
    %14 = arith.mulf %12, %13 : vector<1x16xf32>
    %cst_6 = arith.constant dense<0xFF800000> : vector<4xf32>
    %15 = vector.multi_reduction <maximumf>, %0, %cst_6 [1] : vector<4x16xf32> to vector<4xf32>
    %16 = vector.shape_cast %15 : vector<4xf32> to vector<4x1xf32>
    %17 = vector.broadcast %16 : vector<4x1xf32> to vector<4x16xf32>
    %18 = arith.subf %0, %17 : vector<4x16xf32>
    %19 = math.exp %18 : vector<4x16xf32>
    %cst_7 = arith.constant dense<0.000000e+00> : vector<4xf32>
    %20 = vector.multi_reduction <add>, %19, %cst_7 [1] : vector<4x16xf32> to vector<4xf32>
    %21 = vector.shape_cast %20 : vector<4xf32> to vector<4x1xf32>
    %22 = math.log %21 : vector<4x1xf32>
    %23 = arith.addf %16, %22 : vector<4x1xf32>
    %c0_i32_8 = arith.constant 0 : i32
    %24 = vector.broadcast %c0_i32_8 : i32 to vector<4x16xi32>
    %25 = vector.extract_strided_slice %1 {offsets = [0, 0], sizes = [4, 1], strides = [1, 1]} : vector<4x16xf32> to vector<4x1xf32>
    %26 = vector.broadcast %25 : vector<4x1xf32> to vector<4x16xf32>
    %27 = arith.cmpf olt, %26, %1 : vector<4x16xf32>
    %28 = vector.broadcast %25 : vector<4x1xf32> to vector<4x16xf32>
    %29 = arith.cmpf oeq, %28, %1 : vector<4x16xf32>
    %c0_i32_9 = arith.constant 0 : i32
    %30 = vector.broadcast %c0_i32_9 : i32 to vector<1x16xi32>
    %31 = arith.cmpi sgt, %2, %30 : vector<1x16xi32>
    %32 = vector.broadcast %31 : vector<1x16xi1> to vector<4x16xi1>
    %33 = arith.andi %29, %32 : vector<4x16xi1>
    %34 = arith.ori %27, %33 : vector<4x16xi1>
    %35 = arith.extui %34 : vector<4x16xi1> to vector<4x16xi32>
    %36 = arith.addi %24, %35 : vector<4x16xi32>
    %37 = vector.extract_strided_slice %1 {offsets = [0, 1], sizes = [4, 1], strides = [1, 1]} : vector<4x16xf32> to vector<4x1xf32>
    %38 = vector.broadcast %37 : vector<4x1xf32> to vector<4x16xf32>
    %39 = arith.cmpf olt, %38, %1 : vector<4x16xf32>
    %40 = vector.broadcast %37 : vector<4x1xf32> to vector<4x16xf32>
    %41 = arith.cmpf oeq, %40, %1 : vector<4x16xf32>
    %c1_i32 = arith.constant 1 : i32
    %42 = vector.broadcast %c1_i32 : i32 to vector<1x16xi32>
    %43 = arith.cmpi sgt, %2, %42 : vector<1x16xi32>
    %44 = vector.broadcast %43 : vector<1x16xi1> to vector<4x16xi1>
    %45 = arith.andi %41, %44 : vector<4x16xi1>
    %46 = arith.ori %39, %45 : vector<4x16xi1>
    %47 = arith.extui %46 : vector<4x16xi1> to vector<4x16xi32>
    %48 = arith.addi %36, %47 : vector<4x16xi32>
    %49 = vector.extract_strided_slice %1 {offsets = [0, 2], sizes = [4, 1], strides = [1, 1]} : vector<4x16xf32> to vector<4x1xf32>
    %50 = vector.broadcast %49 : vector<4x1xf32> to vector<4x16xf32>
    %51 = arith.cmpf olt, %50, %1 : vector<4x16xf32>
    %52 = vector.broadcast %49 : vector<4x1xf32> to vector<4x16xf32>
    %53 = arith.cmpf oeq, %52, %1 : vector<4x16xf32>
    %c2_i32 = arith.constant 2 : i32
    %54 = vector.broadcast %c2_i32 : i32 to vector<1x16xi32>
    %55 = arith.cmpi sgt, %2, %54 : vector<1x16xi32>
    %56 = vector.broadcast %55 : vector<1x16xi1> to vector<4x16xi1>
    %57 = arith.andi %53, %56 : vector<4x16xi1>
    %58 = arith.ori %51, %57 : vector<4x16xi1>
    %59 = arith.extui %58 : vector<4x16xi1> to vector<4x16xi32>
    %60 = arith.addi %48, %59 : vector<4x16xi32>
    %61 = vector.extract_strided_slice %1 {offsets = [0, 3], sizes = [4, 1], strides = [1, 1]} : vector<4x16xf32> to vector<4x1xf32>
    %62 = vector.broadcast %61 : vector<4x1xf32> to vector<4x16xf32>
    %63 = arith.cmpf olt, %62, %1 : vector<4x16xf32>
    %64 = vector.broadcast %61 : vector<4x1xf32> to vector<4x16xf32>
    %65 = arith.cmpf oeq, %64, %1 : vector<4x16xf32>
    %c3_i32 = arith.constant 3 : i32
    %66 = vector.broadcast %c3_i32 : i32 to vector<1x16xi32>
    %67 = arith.cmpi sgt, %2, %66 : vector<1x16xi32>
    %68 = vector.broadcast %67 : vector<1x16xi1> to vector<4x16xi1>
    %69 = arith.andi %65, %68 : vector<4x16xi1>
    %70 = arith.ori %63, %69 : vector<4x16xi1>
    %71 = arith.extui %70 : vector<4x16xi1> to vector<4x16xi32>
    %72 = arith.addi %60, %71 : vector<4x16xi32>
    %73 = vector.extract_strided_slice %1 {offsets = [0, 4], sizes = [4, 1], strides = [1, 1]} : vector<4x16xf32> to vector<4x1xf32>
    %74 = vector.broadcast %73 : vector<4x1xf32> to vector<4x16xf32>
    %75 = arith.cmpf olt, %74, %1 : vector<4x16xf32>
    %76 = vector.broadcast %73 : vector<4x1xf32> to vector<4x16xf32>
    %77 = arith.cmpf oeq, %76, %1 : vector<4x16xf32>
    %c4_i32 = arith.constant 4 : i32
    %78 = vector.broadcast %c4_i32 : i32 to vector<1x16xi32>
    %79 = arith.cmpi sgt, %2, %78 : vector<1x16xi32>
    %80 = vector.broadcast %79 : vector<1x16xi1> to vector<4x16xi1>
    %81 = arith.andi %77, %80 : vector<4x16xi1>
    %82 = arith.ori %75, %81 : vector<4x16xi1>
    %83 = arith.extui %82 : vector<4x16xi1> to vector<4x16xi32>
    %84 = arith.addi %72, %83 : vector<4x16xi32>
    %85 = vector.extract_strided_slice %1 {offsets = [0, 5], sizes = [4, 1], strides = [1, 1]} : vector<4x16xf32> to vector<4x1xf32>
    %86 = vector.broadcast %85 : vector<4x1xf32> to vector<4x16xf32>
    %87 = arith.cmpf olt, %86, %1 : vector<4x16xf32>
    %88 = vector.broadcast %85 : vector<4x1xf32> to vector<4x16xf32>
    %89 = arith.cmpf oeq, %88, %1 : vector<4x16xf32>
    %c5_i32 = arith.constant 5 : i32
    %90 = vector.broadcast %c5_i32 : i32 to vector<1x16xi32>
    %91 = arith.cmpi sgt, %2, %90 : vector<1x16xi32>
    %92 = vector.broadcast %91 : vector<1x16xi1> to vector<4x16xi1>
    %93 = arith.andi %89, %92 : vector<4x16xi1>
    %94 = arith.ori %87, %93 : vector<4x16xi1>
    %95 = arith.extui %94 : vector<4x16xi1> to vector<4x16xi32>
    %96 = arith.addi %84, %95 : vector<4x16xi32>
    %97 = vector.extract_strided_slice %1 {offsets = [0, 6], sizes = [4, 1], strides = [1, 1]} : vector<4x16xf32> to vector<4x1xf32>
    %98 = vector.broadcast %97 : vector<4x1xf32> to vector<4x16xf32>
    %99 = arith.cmpf olt, %98, %1 : vector<4x16xf32>
    %100 = vector.broadcast %97 : vector<4x1xf32> to vector<4x16xf32>
    %101 = arith.cmpf oeq, %100, %1 : vector<4x16xf32>
    %c6_i32 = arith.constant 6 : i32
    %102 = vector.broadcast %c6_i32 : i32 to vector<1x16xi32>
    %103 = arith.cmpi sgt, %2, %102 : vector<1x16xi32>
    %104 = vector.broadcast %103 : vector<1x16xi1> to vector<4x16xi1>
    %105 = arith.andi %101, %104 : vector<4x16xi1>
    %106 = arith.ori %99, %105 : vector<4x16xi1>
    %107 = arith.extui %106 : vector<4x16xi1> to vector<4x16xi32>
    %108 = arith.addi %96, %107 : vector<4x16xi32>
    %109 = vector.extract_strided_slice %1 {offsets = [0, 7], sizes = [4, 1], strides = [1, 1]} : vector<4x16xf32> to vector<4x1xf32>
    %110 = vector.broadcast %109 : vector<4x1xf32> to vector<4x16xf32>
    %111 = arith.cmpf olt, %110, %1 : vector<4x16xf32>
    %112 = vector.broadcast %109 : vector<4x1xf32> to vector<4x16xf32>
    %113 = arith.cmpf oeq, %112, %1 : vector<4x16xf32>
    %c7_i32 = arith.constant 7 : i32
    %114 = vector.broadcast %c7_i32 : i32 to vector<1x16xi32>
    %115 = arith.cmpi sgt, %2, %114 : vector<1x16xi32>
    %116 = vector.broadcast %115 : vector<1x16xi1> to vector<4x16xi1>
    %117 = arith.andi %113, %116 : vector<4x16xi1>
    %118 = arith.ori %111, %117 : vector<4x16xi1>
    %119 = arith.extui %118 : vector<4x16xi1> to vector<4x16xi32>
    %120 = arith.addi %108, %119 : vector<4x16xi32>
    %121 = vector.extract_strided_slice %1 {offsets = [0, 8], sizes = [4, 1], strides = [1, 1]} : vector<4x16xf32> to vector<4x1xf32>
    %122 = vector.broadcast %121 : vector<4x1xf32> to vector<4x16xf32>
    %123 = arith.cmpf olt, %122, %1 : vector<4x16xf32>
    %124 = vector.broadcast %121 : vector<4x1xf32> to vector<4x16xf32>
    %125 = arith.cmpf oeq, %124, %1 : vector<4x16xf32>
    %c8_i32 = arith.constant 8 : i32
    %126 = vector.broadcast %c8_i32 : i32 to vector<1x16xi32>
    %127 = arith.cmpi sgt, %2, %126 : vector<1x16xi32>
    %128 = vector.broadcast %127 : vector<1x16xi1> to vector<4x16xi1>
    %129 = arith.andi %125, %128 : vector<4x16xi1>
    %130 = arith.ori %123, %129 : vector<4x16xi1>
    %131 = arith.extui %130 : vector<4x16xi1> to vector<4x16xi32>
    %132 = arith.addi %120, %131 : vector<4x16xi32>
    %133 = vector.extract_strided_slice %1 {offsets = [0, 9], sizes = [4, 1], strides = [1, 1]} : vector<4x16xf32> to vector<4x1xf32>
    %134 = vector.broadcast %133 : vector<4x1xf32> to vector<4x16xf32>
    %135 = arith.cmpf olt, %134, %1 : vector<4x16xf32>
    %136 = vector.broadcast %133 : vector<4x1xf32> to vector<4x16xf32>
    %137 = arith.cmpf oeq, %136, %1 : vector<4x16xf32>
    %c9_i32 = arith.constant 9 : i32
    %138 = vector.broadcast %c9_i32 : i32 to vector<1x16xi32>
    %139 = arith.cmpi sgt, %2, %138 : vector<1x16xi32>
    %140 = vector.broadcast %139 : vector<1x16xi1> to vector<4x16xi1>
    %141 = arith.andi %137, %140 : vector<4x16xi1>
    %142 = arith.ori %135, %141 : vector<4x16xi1>
    %143 = arith.extui %142 : vector<4x16xi1> to vector<4x16xi32>
    %144 = arith.addi %132, %143 : vector<4x16xi32>
    %145 = vector.extract_strided_slice %1 {offsets = [0, 10], sizes = [4, 1], strides = [1, 1]} : vector<4x16xf32> to vector<4x1xf32>
    %146 = vector.broadcast %145 : vector<4x1xf32> to vector<4x16xf32>
    %147 = arith.cmpf olt, %146, %1 : vector<4x16xf32>
    %148 = vector.broadcast %145 : vector<4x1xf32> to vector<4x16xf32>
    %149 = arith.cmpf oeq, %148, %1 : vector<4x16xf32>
    %c10_i32 = arith.constant 10 : i32
    %150 = vector.broadcast %c10_i32 : i32 to vector<1x16xi32>
    %151 = arith.cmpi sgt, %2, %150 : vector<1x16xi32>
    %152 = vector.broadcast %151 : vector<1x16xi1> to vector<4x16xi1>
    %153 = arith.andi %149, %152 : vector<4x16xi1>
    %154 = arith.ori %147, %153 : vector<4x16xi1>
    %155 = arith.extui %154 : vector<4x16xi1> to vector<4x16xi32>
    %156 = arith.addi %144, %155 : vector<4x16xi32>
    %157 = vector.extract_strided_slice %1 {offsets = [0, 11], sizes = [4, 1], strides = [1, 1]} : vector<4x16xf32> to vector<4x1xf32>
    %158 = vector.broadcast %157 : vector<4x1xf32> to vector<4x16xf32>
    %159 = arith.cmpf olt, %158, %1 : vector<4x16xf32>
    %160 = vector.broadcast %157 : vector<4x1xf32> to vector<4x16xf32>
    %161 = arith.cmpf oeq, %160, %1 : vector<4x16xf32>
    %c11_i32 = arith.constant 11 : i32
    %162 = vector.broadcast %c11_i32 : i32 to vector<1x16xi32>
    %163 = arith.cmpi sgt, %2, %162 : vector<1x16xi32>
    %164 = vector.broadcast %163 : vector<1x16xi1> to vector<4x16xi1>
    %165 = arith.andi %161, %164 : vector<4x16xi1>
    %166 = arith.ori %159, %165 : vector<4x16xi1>
    %167 = arith.extui %166 : vector<4x16xi1> to vector<4x16xi32>
    %168 = arith.addi %156, %167 : vector<4x16xi32>
    %169 = vector.extract_strided_slice %1 {offsets = [0, 12], sizes = [4, 1], strides = [1, 1]} : vector<4x16xf32> to vector<4x1xf32>
    %170 = vector.broadcast %169 : vector<4x1xf32> to vector<4x16xf32>
    %171 = arith.cmpf olt, %170, %1 : vector<4x16xf32>
    %172 = vector.broadcast %169 : vector<4x1xf32> to vector<4x16xf32>
    %173 = arith.cmpf oeq, %172, %1 : vector<4x16xf32>
    %c12_i32 = arith.constant 12 : i32
    %174 = vector.broadcast %c12_i32 : i32 to vector<1x16xi32>
    %175 = arith.cmpi sgt, %2, %174 : vector<1x16xi32>
    %176 = vector.broadcast %175 : vector<1x16xi1> to vector<4x16xi1>
    %177 = arith.andi %173, %176 : vector<4x16xi1>
    %178 = arith.ori %171, %177 : vector<4x16xi1>
    %179 = arith.extui %178 : vector<4x16xi1> to vector<4x16xi32>
    %180 = arith.addi %168, %179 : vector<4x16xi32>
    %181 = vector.extract_strided_slice %1 {offsets = [0, 13], sizes = [4, 1], strides = [1, 1]} : vector<4x16xf32> to vector<4x1xf32>
    %182 = vector.broadcast %181 : vector<4x1xf32> to vector<4x16xf32>
    %183 = arith.cmpf olt, %182, %1 : vector<4x16xf32>
    %184 = vector.broadcast %181 : vector<4x1xf32> to vector<4x16xf32>
    %185 = arith.cmpf oeq, %184, %1 : vector<4x16xf32>
    %c13_i32 = arith.constant 13 : i32
    %186 = vector.broadcast %c13_i32 : i32 to vector<1x16xi32>
    %187 = arith.cmpi sgt, %2, %186 : vector<1x16xi32>
    %188 = vector.broadcast %187 : vector<1x16xi1> to vector<4x16xi1>
    %189 = arith.andi %185, %188 : vector<4x16xi1>
    %190 = arith.ori %183, %189 : vector<4x16xi1>
    %191 = arith.extui %190 : vector<4x16xi1> to vector<4x16xi32>
    %192 = arith.addi %180, %191 : vector<4x16xi32>
    %193 = vector.extract_strided_slice %1 {offsets = [0, 14], sizes = [4, 1], strides = [1, 1]} : vector<4x16xf32> to vector<4x1xf32>
    %194 = vector.broadcast %193 : vector<4x1xf32> to vector<4x16xf32>
    %195 = arith.cmpf olt, %194, %1 : vector<4x16xf32>
    %196 = vector.broadcast %193 : vector<4x1xf32> to vector<4x16xf32>
    %197 = arith.cmpf oeq, %196, %1 : vector<4x16xf32>
    %c14_i32 = arith.constant 14 : i32
    %198 = vector.broadcast %c14_i32 : i32 to vector<1x16xi32>
    %199 = arith.cmpi sgt, %2, %198 : vector<1x16xi32>
    %200 = vector.broadcast %199 : vector<1x16xi1> to vector<4x16xi1>
    %201 = arith.andi %197, %200 : vector<4x16xi1>
    %202 = arith.ori %195, %201 : vector<4x16xi1>
    %203 = arith.extui %202 : vector<4x16xi1> to vector<4x16xi32>
    %204 = arith.addi %192, %203 : vector<4x16xi32>
    %205 = vector.extract_strided_slice %1 {offsets = [0, 15], sizes = [4, 1], strides = [1, 1]} : vector<4x16xf32> to vector<4x1xf32>
    %206 = vector.broadcast %205 : vector<4x1xf32> to vector<4x16xf32>
    %207 = arith.cmpf olt, %206, %1 : vector<4x16xf32>
    %208 = vector.broadcast %205 : vector<4x1xf32> to vector<4x16xf32>
    %209 = arith.cmpf oeq, %208, %1 : vector<4x16xf32>
    %c15_i32 = arith.constant 15 : i32
    %210 = vector.broadcast %c15_i32 : i32 to vector<1x16xi32>
    %211 = arith.cmpi sgt, %2, %210 : vector<1x16xi32>
    %212 = vector.broadcast %211 : vector<1x16xi1> to vector<4x16xi1>
    %213 = arith.andi %209, %212 : vector<4x16xi1>
    %214 = arith.ori %207, %213 : vector<4x16xi1>
    %215 = arith.extui %214 : vector<4x16xi1> to vector<4x16xi32>
    %216 = arith.addi %204, %215 : vector<4x16xi32>
    %cst_10 = arith.constant 0.000000e+00 : f32
    %217 = vector.broadcast %cst_10 : f32 to vector<4x16xf32>
    %c0_i32_11 = arith.constant 0 : i32
    %218 = vector.broadcast %c0_i32_11 : i32 to vector<4x16xi32>
    %219 = arith.cmpi eq, %216, %218 : vector<4x16xi32>
    %220 = vector.extract_strided_slice %0 {offsets = [0, 0], sizes = [4, 1], strides = [1, 1]} : vector<4x16xf32> to vector<4x1xf32>
    %cst_12 = arith.constant 0.000000e+00 : f32
    %221 = vector.shape_cast %220 : vector<4x1xf32> to vector<4x1xf32>
    %222 = vector.broadcast %221 : vector<4x1xf32> to vector<4x16xf32>
    %223 = vector.broadcast %cst_12 : f32 to vector<4x16xf32>
    %224 = arith.select %219, %222, %223 : vector<4x16xi1>, vector<4x16xf32>
    %225 = arith.addf %217, %224 : vector<4x16xf32>
    %c1_i32_13 = arith.constant 1 : i32
    %226 = vector.broadcast %c1_i32_13 : i32 to vector<4x16xi32>
    %227 = arith.cmpi eq, %216, %226 : vector<4x16xi32>
    %228 = vector.extract_strided_slice %0 {offsets = [0, 1], sizes = [4, 1], strides = [1, 1]} : vector<4x16xf32> to vector<4x1xf32>
    %cst_14 = arith.constant 0.000000e+00 : f32
    %229 = vector.shape_cast %228 : vector<4x1xf32> to vector<4x1xf32>
    %230 = vector.broadcast %229 : vector<4x1xf32> to vector<4x16xf32>
    %231 = vector.broadcast %cst_14 : f32 to vector<4x16xf32>
    %232 = arith.select %227, %230, %231 : vector<4x16xi1>, vector<4x16xf32>
    %233 = arith.addf %225, %232 : vector<4x16xf32>
    %c2_i32_15 = arith.constant 2 : i32
    %234 = vector.broadcast %c2_i32_15 : i32 to vector<4x16xi32>
    %235 = arith.cmpi eq, %216, %234 : vector<4x16xi32>
    %236 = vector.extract_strided_slice %0 {offsets = [0, 2], sizes = [4, 1], strides = [1, 1]} : vector<4x16xf32> to vector<4x1xf32>
    %cst_16 = arith.constant 0.000000e+00 : f32
    %237 = vector.shape_cast %236 : vector<4x1xf32> to vector<4x1xf32>
    %238 = vector.broadcast %237 : vector<4x1xf32> to vector<4x16xf32>
    %239 = vector.broadcast %cst_16 : f32 to vector<4x16xf32>
    %240 = arith.select %235, %238, %239 : vector<4x16xi1>, vector<4x16xf32>
    %241 = arith.addf %233, %240 : vector<4x16xf32>
    %c3_i32_17 = arith.constant 3 : i32
    %242 = vector.broadcast %c3_i32_17 : i32 to vector<4x16xi32>
    %243 = arith.cmpi eq, %216, %242 : vector<4x16xi32>
    %244 = vector.extract_strided_slice %0 {offsets = [0, 3], sizes = [4, 1], strides = [1, 1]} : vector<4x16xf32> to vector<4x1xf32>
    %cst_18 = arith.constant 0.000000e+00 : f32
    %245 = vector.shape_cast %244 : vector<4x1xf32> to vector<4x1xf32>
    %246 = vector.broadcast %245 : vector<4x1xf32> to vector<4x16xf32>
    %247 = vector.broadcast %cst_18 : f32 to vector<4x16xf32>
    %248 = arith.select %243, %246, %247 : vector<4x16xi1>, vector<4x16xf32>
    %249 = arith.addf %241, %248 : vector<4x16xf32>
    %c4_i32_19 = arith.constant 4 : i32
    %250 = vector.broadcast %c4_i32_19 : i32 to vector<4x16xi32>
    %251 = arith.cmpi eq, %216, %250 : vector<4x16xi32>
    %252 = vector.extract_strided_slice %0 {offsets = [0, 4], sizes = [4, 1], strides = [1, 1]} : vector<4x16xf32> to vector<4x1xf32>
    %cst_20 = arith.constant 0.000000e+00 : f32
    %253 = vector.shape_cast %252 : vector<4x1xf32> to vector<4x1xf32>
    %254 = vector.broadcast %253 : vector<4x1xf32> to vector<4x16xf32>
    %255 = vector.broadcast %cst_20 : f32 to vector<4x16xf32>
    %256 = arith.select %251, %254, %255 : vector<4x16xi1>, vector<4x16xf32>
    %257 = arith.addf %249, %256 : vector<4x16xf32>
    %c5_i32_21 = arith.constant 5 : i32
    %258 = vector.broadcast %c5_i32_21 : i32 to vector<4x16xi32>
    %259 = arith.cmpi eq, %216, %258 : vector<4x16xi32>
    %260 = vector.extract_strided_slice %0 {offsets = [0, 5], sizes = [4, 1], strides = [1, 1]} : vector<4x16xf32> to vector<4x1xf32>
    %cst_22 = arith.constant 0.000000e+00 : f32
    %261 = vector.shape_cast %260 : vector<4x1xf32> to vector<4x1xf32>
    %262 = vector.broadcast %261 : vector<4x1xf32> to vector<4x16xf32>
    %263 = vector.broadcast %cst_22 : f32 to vector<4x16xf32>
    %264 = arith.select %259, %262, %263 : vector<4x16xi1>, vector<4x16xf32>
    %265 = arith.addf %257, %264 : vector<4x16xf32>
    %c6_i32_23 = arith.constant 6 : i32
    %266 = vector.broadcast %c6_i32_23 : i32 to vector<4x16xi32>
    %267 = arith.cmpi eq, %216, %266 : vector<4x16xi32>
    %268 = vector.extract_strided_slice %0 {offsets = [0, 6], sizes = [4, 1], strides = [1, 1]} : vector<4x16xf32> to vector<4x1xf32>
    %cst_24 = arith.constant 0.000000e+00 : f32
    %269 = vector.shape_cast %268 : vector<4x1xf32> to vector<4x1xf32>
    %270 = vector.broadcast %269 : vector<4x1xf32> to vector<4x16xf32>
    %271 = vector.broadcast %cst_24 : f32 to vector<4x16xf32>
    %272 = arith.select %267, %270, %271 : vector<4x16xi1>, vector<4x16xf32>
    %273 = arith.addf %265, %272 : vector<4x16xf32>
    %c7_i32_25 = arith.constant 7 : i32
    %274 = vector.broadcast %c7_i32_25 : i32 to vector<4x16xi32>
    %275 = arith.cmpi eq, %216, %274 : vector<4x16xi32>
    %276 = vector.extract_strided_slice %0 {offsets = [0, 7], sizes = [4, 1], strides = [1, 1]} : vector<4x16xf32> to vector<4x1xf32>
    %cst_26 = arith.constant 0.000000e+00 : f32
    %277 = vector.shape_cast %276 : vector<4x1xf32> to vector<4x1xf32>
    %278 = vector.broadcast %277 : vector<4x1xf32> to vector<4x16xf32>
    %279 = vector.broadcast %cst_26 : f32 to vector<4x16xf32>
    %280 = arith.select %275, %278, %279 : vector<4x16xi1>, vector<4x16xf32>
    %281 = arith.addf %273, %280 : vector<4x16xf32>
    %c8_i32_27 = arith.constant 8 : i32
    %282 = vector.broadcast %c8_i32_27 : i32 to vector<4x16xi32>
    %283 = arith.cmpi eq, %216, %282 : vector<4x16xi32>
    %284 = vector.extract_strided_slice %0 {offsets = [0, 8], sizes = [4, 1], strides = [1, 1]} : vector<4x16xf32> to vector<4x1xf32>
    %cst_28 = arith.constant 0.000000e+00 : f32
    %285 = vector.shape_cast %284 : vector<4x1xf32> to vector<4x1xf32>
    %286 = vector.broadcast %285 : vector<4x1xf32> to vector<4x16xf32>
    %287 = vector.broadcast %cst_28 : f32 to vector<4x16xf32>
    %288 = arith.select %283, %286, %287 : vector<4x16xi1>, vector<4x16xf32>
    %289 = arith.addf %281, %288 : vector<4x16xf32>
    %c9_i32_29 = arith.constant 9 : i32
    %290 = vector.broadcast %c9_i32_29 : i32 to vector<4x16xi32>
    %291 = arith.cmpi eq, %216, %290 : vector<4x16xi32>
    %292 = vector.extract_strided_slice %0 {offsets = [0, 9], sizes = [4, 1], strides = [1, 1]} : vector<4x16xf32> to vector<4x1xf32>
    %cst_30 = arith.constant 0.000000e+00 : f32
    %293 = vector.shape_cast %292 : vector<4x1xf32> to vector<4x1xf32>
    %294 = vector.broadcast %293 : vector<4x1xf32> to vector<4x16xf32>
    %295 = vector.broadcast %cst_30 : f32 to vector<4x16xf32>
    %296 = arith.select %291, %294, %295 : vector<4x16xi1>, vector<4x16xf32>
    %297 = arith.addf %289, %296 : vector<4x16xf32>
    %c10_i32_31 = arith.constant 10 : i32
    %298 = vector.broadcast %c10_i32_31 : i32 to vector<4x16xi32>
    %299 = arith.cmpi eq, %216, %298 : vector<4x16xi32>
    %300 = vector.extract_strided_slice %0 {offsets = [0, 10], sizes = [4, 1], strides = [1, 1]} : vector<4x16xf32> to vector<4x1xf32>
    %cst_32 = arith.constant 0.000000e+00 : f32
    %301 = vector.shape_cast %300 : vector<4x1xf32> to vector<4x1xf32>
    %302 = vector.broadcast %301 : vector<4x1xf32> to vector<4x16xf32>
    %303 = vector.broadcast %cst_32 : f32 to vector<4x16xf32>
    %304 = arith.select %299, %302, %303 : vector<4x16xi1>, vector<4x16xf32>
    %305 = arith.addf %297, %304 : vector<4x16xf32>
    %c11_i32_33 = arith.constant 11 : i32
    %306 = vector.broadcast %c11_i32_33 : i32 to vector<4x16xi32>
    %307 = arith.cmpi eq, %216, %306 : vector<4x16xi32>
    %308 = vector.extract_strided_slice %0 {offsets = [0, 11], sizes = [4, 1], strides = [1, 1]} : vector<4x16xf32> to vector<4x1xf32>
    %cst_34 = arith.constant 0.000000e+00 : f32
    %309 = vector.shape_cast %308 : vector<4x1xf32> to vector<4x1xf32>
    %310 = vector.broadcast %309 : vector<4x1xf32> to vector<4x16xf32>
    %311 = vector.broadcast %cst_34 : f32 to vector<4x16xf32>
    %312 = arith.select %307, %310, %311 : vector<4x16xi1>, vector<4x16xf32>
    %313 = arith.addf %305, %312 : vector<4x16xf32>
    %c12_i32_35 = arith.constant 12 : i32
    %314 = vector.broadcast %c12_i32_35 : i32 to vector<4x16xi32>
    %315 = arith.cmpi eq, %216, %314 : vector<4x16xi32>
    %316 = vector.extract_strided_slice %0 {offsets = [0, 12], sizes = [4, 1], strides = [1, 1]} : vector<4x16xf32> to vector<4x1xf32>
    %cst_36 = arith.constant 0.000000e+00 : f32
    %317 = vector.shape_cast %316 : vector<4x1xf32> to vector<4x1xf32>
    %318 = vector.broadcast %317 : vector<4x1xf32> to vector<4x16xf32>
    %319 = vector.broadcast %cst_36 : f32 to vector<4x16xf32>
    %320 = arith.select %315, %318, %319 : vector<4x16xi1>, vector<4x16xf32>
    %321 = arith.addf %313, %320 : vector<4x16xf32>
    %c13_i32_37 = arith.constant 13 : i32
    %322 = vector.broadcast %c13_i32_37 : i32 to vector<4x16xi32>
    %323 = arith.cmpi eq, %216, %322 : vector<4x16xi32>
    %324 = vector.extract_strided_slice %0 {offsets = [0, 13], sizes = [4, 1], strides = [1, 1]} : vector<4x16xf32> to vector<4x1xf32>
    %cst_38 = arith.constant 0.000000e+00 : f32
    %325 = vector.shape_cast %324 : vector<4x1xf32> to vector<4x1xf32>
    %326 = vector.broadcast %325 : vector<4x1xf32> to vector<4x16xf32>
    %327 = vector.broadcast %cst_38 : f32 to vector<4x16xf32>
    %328 = arith.select %323, %326, %327 : vector<4x16xi1>, vector<4x16xf32>
    %329 = arith.addf %321, %328 : vector<4x16xf32>
    %c14_i32_39 = arith.constant 14 : i32
    %330 = vector.broadcast %c14_i32_39 : i32 to vector<4x16xi32>
    %331 = arith.cmpi eq, %216, %330 : vector<4x16xi32>
    %332 = vector.extract_strided_slice %0 {offsets = [0, 14], sizes = [4, 1], strides = [1, 1]} : vector<4x16xf32> to vector<4x1xf32>
    %cst_40 = arith.constant 0.000000e+00 : f32
    %333 = vector.shape_cast %332 : vector<4x1xf32> to vector<4x1xf32>
    %334 = vector.broadcast %333 : vector<4x1xf32> to vector<4x16xf32>
    %335 = vector.broadcast %cst_40 : f32 to vector<4x16xf32>
    %336 = arith.select %331, %334, %335 : vector<4x16xi1>, vector<4x16xf32>
    %337 = arith.addf %329, %336 : vector<4x16xf32>
    %c15_i32_41 = arith.constant 15 : i32
    %338 = vector.broadcast %c15_i32_41 : i32 to vector<4x16xi32>
    %339 = arith.cmpi eq, %216, %338 : vector<4x16xi32>
    %340 = vector.extract_strided_slice %0 {offsets = [0, 15], sizes = [4, 1], strides = [1, 1]} : vector<4x16xf32> to vector<4x1xf32>
    %cst_42 = arith.constant 0.000000e+00 : f32
    %341 = vector.shape_cast %340 : vector<4x1xf32> to vector<4x1xf32>
    %342 = vector.broadcast %341 : vector<4x1xf32> to vector<4x16xf32>
    %343 = vector.broadcast %cst_42 : f32 to vector<4x16xf32>
    %344 = arith.select %339, %342, %343 : vector<4x16xi1>, vector<4x16xf32>
    %345 = arith.addf %337, %344 : vector<4x16xf32>
    %346 = vector.broadcast %14 : vector<1x16xf32> to vector<4x16xf32>
    %347 = arith.mulf %346, %345 : vector<4x16xf32>
    %cst_43 = arith.constant dense<0.000000e+00> : vector<4xf32>
    %348 = vector.multi_reduction <add>, %347, %cst_43 [1] : vector<4x16xf32> to vector<4xf32>
    %349 = vector.shape_cast %348 : vector<4xf32> to vector<4x1xf32>
    %350 = arith.subf %23, %349 : vector<4x1xf32>
    %351 = tpu.iota {dimensions = array<i32: 0>} : vector<4x1xi32>
    %c4_i32_44 = arith.constant 4 : i32
    %352 = arith.muli %arg0, %c4_i32_44 : i32
    %353 = vector.broadcast %352 : i32 to vector<4x1xi32>
    %354 = arith.addi %351, %353 : vector<4x1xi32>
    %c4_i32_45 = arith.constant 4 : i32
    %355 = vector.broadcast %c4_i32_45 : i32 to vector<4x1xi32>
    %356 = arith.cmpi slt, %354, %355 : vector<4x1xi32>
    %cst_46 = arith.constant 0.000000e+00 : f32
    %357 = vector.broadcast %cst_46 : f32 to vector<4x1xf32>
    %358 = arith.select %356, %350, %357 : vector<4x1xi1>, vector<4x1xf32>
    %c0_47 = arith.constant 0 : index
    %c0_48 = arith.constant 0 : index
    %359 = vector.load %arg3[%c0_47, %c0_48] : memref<4x1xf32, #tpu.memory_space<vmem>>, vector<4x1xf32>
    tpu.vector_store %arg3[%c0_47, %c0_48], %358 {strides = array<i32>} : memref<4x1xf32, #tpu.memory_space<vmem>>, vector<4x1xf32>,
    return
  }
  func.func @transform_0(%arg0: i32) -> (i32, i32) {
    %c0_i32 = arith.constant 0 : i32
    %c0_i32_0 = arith.constant 0 : i32
    return %arg0, %c0_i32 : i32, i32
  }
  func.func @transform_1(%arg0: i32) -> (i32, i32) {
    %c0_i32 = arith.constant 0 : i32
    %c0_i32_0 = arith.constant 0 : i32
    return %arg0, %c0_i32 : i32, i32
  }
  func.func @transform_2(%arg0: i32) -> (i32, i32) {
    %c0_i32 = arith.constant 0 : i32
    %c0_i32_0 = arith.constant 0 : i32
    return %arg0, %c0_i32 : i32, i32
  }
}

</mosaic_0001>

<llo_original>
// kernel: tpu_custom_call.1
$region0: #{tpu_custom_call.1}
  #allocation0 [shape = 'u32[]', space=smem, size = 0x4, offset = 0x4, fixed_abs, tag = 'smem constant byte address 0x4 - core index']
  #allocation1 [shape = 'u32[144,128]{1,0:T(1,128)}', space=vmem, size = 0x12000, scoped, tag = 'internal scratch']
  %s0 = inlined_call_operand.hbm [shape: f32[4,16], index: 0, kind: input, shape index: {}]
  %s1 = inlined_call_operand.hbm [shape: f32[4,16], index: 1, kind: input, shape index: {}]
  %s2 = inlined_call_operand.vmem [shape: f32[4,1], index: 2, kind: output, shape index: {}]
  %s3 = sld [smem:[#allocation0]]
  $region26: #{tpu_custom_call.1} parent=0
    _
  %s5 = ssub.s32 1, %s3
  %s6 = scalar_select 0, %s5, %s3
  $region1: #{tpu_custom_call.1} parent=0
    #allocation2 [shape = 'u8[2048]{0}', space=vmem, size = 0x800, scoped, tag = 'input window, operand 0, single buffered']
    #allocation3 [shape = 's32[1]{0}', space=sflag, size = 0x4, scoped, tag = 'scoped memory for tpu_custom_call.1']
    #allocation4 [shape = 'u8[2048]{0}', space=vmem, size = 0x800, scoped, tag = 'input window, operand 1, single buffered']
    #allocation5 [shape = 's32[1]{0}', space=sflag, size = 0x4, scoped, tag = 'scoped memory for tpu_custom_call.1']
    %7 = vsyncpa [#allocation3], 0
    %8 = vsyncpa [#allocation5], 0
    // Predicated region
    $region2: #{tpu_custom_call.1} parent=1 // pred_check
      _
    $region3: #{tpu_custom_call.1} parent=1 // pred_check_branch
      %10 = sbr.rel (0) target = $region5
    $region4: #{tpu_custom_call.1} parent=1 // pred_region
      %s12 = ssub.s32 64, 64
      %13 = vsyncadd [#allocation3], %s12
      %s15 = sshll.u32 [#allocation2], 4
      %s16 = int_to_ptr.vmem [resolvable:$true] %s15
      %18 = dma.hbm_to_vmem [thread:$0]  %s0, 64, %s16, [#allocation3]
    $region5: #{tpu_custom_call.1} parent=1 // pred_fallthru
      _
    // Predicated region
    $region6: #{tpu_custom_call.1} parent=1 // pred_check
      _
    $region7: #{tpu_custom_call.1} parent=1 // pred_check_branch
      %20 = sbr.rel (0) target = $region9
    $region8: #{tpu_custom_call.1} parent=1 // pred_region
      %s22 = ssub.s32 64, 64
      %23 = vsyncadd [#allocation5], %s22
      %s25 = sshll.u32 [#allocation4], 4
      %s26 = int_to_ptr.vmem [resolvable:$true] %s25
      %28 = dma.hbm_to_vmem [thread:$0]  %s1, 64, %s26, [#allocation5]
    $region9: #{tpu_custom_call.1} parent=1 // pred_fallthru
      _
    // Predicated region
    $region10: #{tpu_custom_call.1} parent=1 // pred_check
      _
    $region11: #{tpu_custom_call.1} parent=1 // pred_check_branch
      %30 = sbr.rel (0) target = $region13
    $region12: #{tpu_custom_call.1} parent=1 // pred_region
      %31 = dma.done [#allocation3], 64
    $region13: #{tpu_custom_call.1} parent=1 // pred_fallthru
      _
    // Predicated region
    $region14: #{tpu_custom_call.1} parent=1 // pred_check
      _
    $region15: #{tpu_custom_call.1} parent=1 // pred_check_branch
      %33 = sbr.rel (0) target = $region17
    $region16: #{tpu_custom_call.1} parent=1 // pred_region
      %34 = dma.done [#allocation5], 64
    $region17: #{tpu_custom_call.1} parent=1 // pred_fallthru
      _
    %v35 = vld [vmem:[#allocation2] sm:$0xf]
    %v36 = vld [vmem:[#allocation4] sm:$0xf]
    %v37 = vlaneseq
    %v38 = vand.u32 %v37, 127
    %v39 = vcvt.s32.f32 %v38
    %v40 = vsub.f32 %v39, 15.0
    %v41 = vmul.f32 %v40, 1.442695
    %v42 = vpow.pop %v41
    %vm43 = vcmp.eq.s32.totalorder %v38, 0
    %v44 = vsel %vm43, 0.0, %v42
    %v45 = vmul.f32 %v44, 0.6321207
    %vm46 = vcmask 125952
    %v47 = vsel %vm46, %v35, -inf
    %48 = vmax.xlane.f32.xlu0 %v47
    %v49 = vpop.xlane.xlu0 %48
    %v50 = vsub.f32 %v35, %v49
    %v51 = vmul.f32 %v50, 1.442695
    %v52 = vpow.pop %v51
    %v53 = vsel %vm46, %v52, 0.0
    %54 = vadd.xlane.f32.xlu0 %v53
    %v55 = vpop.xlane.xlu0 %54
    %v56 = vlog2.pop %v55
    %v57 = vmul.f32 %v56, 0.6931472
    %v58 = vadd.f32 %v49, %v57
    %60 = vset.pattern.permute.xlu0 0
    %61 = vperm.xlu0 %60, %v36
    %v62 = vpop.permute.xlu0 %61
    %vm64 = vcmp.lt.f32.partialorder %v62, %v36
    %vm65 = vcmp.eq.f32.partialorder %v62, %v36
    %vm66 = vcmp.gt.s32.totalorder %v38, 0
    %v67 = vsel %vm66, 1, 0
    %vm68 = vcmp.eq.s32.totalorder %v67, 1
    %vm69 = vmand %vm65, %vm68
    %vm70 = vmor %vm64, %vm69
    %v71 = vsel %vm70, 1, 0
    %72 = vset.pattern.permute.xlu0 1
    %73 = vperm.xlu0 %72, %v36
    %v74 = vpop.permute.xlu0 %73
    %vm76 = vcmp.lt.f32.partialorder %v74, %v36
    %vm77 = vcmp.eq.f32.partialorder %v74, %v36
    %vm78 = vcmp.gt.s32.totalorder %v38, 1
    %v79 = vsel %vm78, 1, 0
    %vm80 = vcmp.eq.s32.totalorder %v79, 1
    %vm81 = vmand %vm77, %vm80
    %vm82 = vmor %vm76, %vm81
    %v83 = vsel %vm82, 1, 0
    %v84 = vadd.s32 %v71, %v83
    %85 = vset.pattern.permute.xlu0 2
    %86 = vperm.xlu0 %85, %v36
    %v87 = vpop.permute.xlu0 %86
    %vm89 = vcmp.lt.f32.partialorder %v87, %v36
    %vm90 = vcmp.eq.f32.partialorder %v87, %v36
    %vm91 = vcmp.gt.s32.totalorder %v38, 2
    %v92 = vsel %vm91, 1, 0
    %vm93 = vcmp.eq.s32.totalorder %v92, 1
    %vm94 = vmand %vm90, %vm93
    %vm95 = vmor %vm89, %vm94
    %v96 = vsel %vm95, 1, 0
    %v97 = vadd.s32 %v84, %v96
    %98 = vset.pattern.permute.xlu0 3
    %99 = vperm.xlu0 %98, %v36
    %v100 = vpop.permute.xlu0 %99
    %vm102 = vcmp.lt.f32.partialorder %v100, %v36
    %vm103 = vcmp.eq.f32.partialorder %v100, %v36
    %vm104 = vcmp.gt.s32.totalorder %v38, 3
    %v105 = vsel %vm104, 1, 0
    %vm106 = vcmp.eq.s32.totalorder %v105, 1
    %vm107 = vmand %vm103, %vm106
    %vm108 = vmor %vm102, %vm107
    %v109 = vsel %vm108, 1, 0
    %v110 = vadd.s32 %v97, %v109
    %111 = vset.pattern.permute.xlu0 4
    %112 = vperm.xlu0 %111, %v36
    %v113 = vpop.permute.xlu0 %112
    %vm115 = vcmp.lt.f32.partialorder %v113, %v36
    %vm116 = vcmp.eq.f32.partialorder %v113, %v36
    %vm117 = vcmp.gt.s32.totalorder %v38, 4
    %v118 = vsel %vm117, 1, 0
    %vm119 = vcmp.eq.s32.totalorder %v118, 1
    %vm120 = vmand %vm116, %vm119
    %vm121 = vmor %vm115, %vm120
    %v122 = vsel %vm121, 1, 0
    %v123 = vadd.s32 %v110, %v122
    %124 = vset.pattern.permute.xlu0 5
    %125 = vperm.xlu0 %124, %v36
    %v126 = vpop.permute.xlu0 %125
    %vm128 = vcmp.lt.f32.partialorder %v126, %v36
    %vm129 = vcmp.eq.f32.partialorder %v126, %v36
    %vm130 = vcmp.gt.s32.totalorder %v38, 5
    %v131 = vsel %vm130, 1, 0
    %vm132 = vcmp.eq.s32.totalorder %v131, 1
    %vm133 = vmand %vm129, %vm132
    %vm134 = vmor %vm128, %vm133
    %v135 = vsel %vm134, 1, 0
    %v136 = vadd.s32 %v123, %v135
    %137 = vset.pattern.permute.xlu0 6
    %138 = vperm.xlu0 %137, %v36
    %v139 = vpop.permute.xlu0 %138
    %vm141 = vcmp.lt.f32.partialorder %v139, %v36
    %vm142 = vcmp.eq.f32.partialorder %v139, %v36
    %vm143 = vcmp.gt.s32.totalorder %v38, 6
    %v144 = vsel %vm143, 1, 0
    %vm145 = vcmp.eq.s32.totalorder %v144, 1
    %vm146 = vmand %vm142, %vm145
    %vm147 = vmor %vm141, %vm146
    %v148 = vsel %vm147, 1, 0
    %v149 = vadd.s32 %v136, %v148
    %150 = vset.pattern.permute.xlu0 7
    %151 = vperm.xlu0 %150, %v36
    %v152 = vpop.permute.xlu0 %151
    %vm154 = vcmp.lt.f32.partialorder %v152, %v36
    %vm155 = vcmp.eq.f32.partialorder %v152, %v36
    %vm156 = vcmp.gt.s32.totalorder %v38, 7
    %v157 = vsel %vm156, 1, 0
    %vm158 = vcmp.eq.s32.totalorder %v157, 1
    %vm159 = vmand %vm155, %vm158
    %vm160 = vmor %vm154, %vm159
    %v161 = vsel %vm160, 1, 0
    %v162 = vadd.s32 %v149, %v161
    %163 = vset.pattern.permute.xlu0 8
    %164 = vperm.xlu0 %163, %v36
    %v165 = vpop.permute.xlu0 %164
    %vm167 = vcmp.lt.f32.partialorder %v165, %v36
    %vm168 = vcmp.eq.f32.partialorder %v165, %v36
    %vm169 = vcmp.gt.s32.totalorder %v38, 8
    %v170 = vsel %vm169, 1, 0
    %vm171 = vcmp.eq.s32.totalorder %v170, 1
    %vm172 = vmand %vm168, %vm171
    %vm173 = vmor %vm167, %vm172
    %v174 = vsel %vm173, 1, 0
    %v175 = vadd.s32 %v162, %v174
    %176 = vset.pattern.permute.xlu0 9
    %177 = vperm.xlu0 %176, %v36
    %v178 = vpop.permute.xlu0 %177
    %vm180 = vcmp.lt.f32.partialorder %v178, %v36
    %vm181 = vcmp.eq.f32.partialorder %v178, %v36
    %vm182 = vcmp.gt.s32.totalorder %v38, 9
    %v183 = vsel %vm182, 1, 0
    %vm184 = vcmp.eq.s32.totalorder %v183, 1
    %vm185 = vmand %vm181, %vm184
    %vm186 = vmor %vm180, %vm185
    %v187 = vsel %vm186, 1, 0
    %v188 = vadd.s32 %v175, %v187
    %189 = vset.pattern.permute.xlu0 10
    %190 = vperm.xlu0 %189, %v36
    %v191 = vpop.permute.xlu0 %190
    %vm193 = vcmp.lt.f32.partialorder %v191, %v36
    %vm194 = vcmp.eq.f32.partialorder %v191, %v36
    %vm195 = vcmp.gt.s32.totalorder %v38, 10
    %v196 = vsel %vm195, 1, 0
    %vm197 = vcmp.eq.s32.totalorder %v196, 1
    %vm198 = vmand %vm194, %vm197
    %vm199 = vmor %vm193, %vm198
    %v200 = vsel %vm199, 1, 0
    %v201 = vadd.s32 %v188, %v200
    %202 = vset.pattern.permute.xlu0 11
    %203 = vperm.xlu0 %202, %v36
    %v204 = vpop.permute.xlu0 %203
    %vm206 = vcmp.lt.f32.partialorder %v204, %v36
    %vm207 = vcmp.eq.f32.partialorder %v204, %v36
    %vm208 = vcmp.gt.s32.totalorder %v38, 11
    %v209 = vsel %vm208, 1, 0
    %vm210 = vcmp.eq.s32.totalorder %v209, 1
    %vm211 = vmand %vm207, %vm210
    %vm212 = vmor %vm206, %vm211
    %v213 = vsel %vm212, 1, 0
    %v214 = vadd.s32 %v201, %v213
    %215 = vset.pattern.permute.xlu0 12
    %216 = vperm.xlu0 %215, %v36
    %v217 = vpop.permute.xlu0 %216
    %vm219 = vcmp.lt.f32.partialorder %v217, %v36
    %vm220 = vcmp.eq.f32.partialorder %v217, %v36
    %vm221 = vcmp.gt.s32.totalorder %v38, 12
    %v222 = vsel %vm221, 1, 0
    %vm223 = vcmp.eq.s32.totalorder %v222, 1
    %vm224 = vmand %vm220, %vm223
    %vm225 = vmor %vm219, %vm224
    %v226 = vsel %vm225, 1, 0
    %v227 = vadd.s32 %v214, %v226
    %228 = vset.pattern.permute.xlu0 13
    %229 = vperm.xlu0 %228, %v36
    %v230 = vpop.permute.xlu0 %229
    %vm232 = vcmp.lt.f32.partialorder %v230, %v36
    %vm233 = vcmp.eq.f32.partialorder %v230, %v36
    %vm234 = vcmp.gt.s32.totalorder %v38, 13
    %v235 = vsel %vm234, 1, 0
    %vm236 = vcmp.eq.s32.totalorder %v235, 1
    %vm237 = vmand %vm233, %vm236
    %vm238 = vmor %vm232, %vm237
    %v239 = vsel %vm238, 1, 0
    %v240 = vadd.s32 %v227, %v239
    %241 = vset.pattern.permute.xlu0 14
    %242 = vperm.xlu0 %241, %v36
    %v243 = vpop.permute.xlu0 %242
    %vm245 = vcmp.lt.f32.partialorder %v243, %v36
    %vm246 = vcmp.eq.f32.partialorder %v243, %v36
    %vm247 = vcmp.gt.s32.totalorder %v38, 14
    %v248 = vsel %vm247, 1, 0
    %vm249 = vcmp.eq.s32.totalorder %v248, 1
    %vm250 = vmand %vm246, %vm249
    %vm251 = vmor %vm245, %vm250
    %v252 = vsel %vm251, 1, 0
    %v253 = vadd.s32 %v240, %v252
    %254 = vset.pattern.permute.xlu0 15
    %255 = vperm.xlu0 %254, %v36
    %v256 = vpop.permute.xlu0 %255
    %vm258 = vcmp.lt.f32.partialorder %v256, %v36
    %vm259 = vcmp.eq.f32.partialorder %v256, %v36
    %vm260 = vcmp.gt.s32.totalorder %v38, 15
    %v261 = vsel %vm260, 1, 0
    %vm262 = vcmp.eq.s32.totalorder %v261, 1
    %vm263 = vmand %vm259, %vm262
    %vm264 = vmor %vm258, %vm263
    %v265 = vsel %vm264, 1, 0
    %v266 = vadd.s32 %v253, %v265
    %vm267 = vcmp.eq.s32.totalorder %v266, 0
    %269 = vset.pattern.permute.xlu0 0
    %270 = vperm.xlu0 %269, %v35
    %v271 = vpop.permute.xlu0 %270
    %v273 = vsel %vm267, %v271, 0.0
    %v274 = vadd.f32 %v273, 0.0
    %vm275 = vcmp.eq.s32.totalorder %v266, 1
    %276 = vset.pattern.permute.xlu0 1
    %277 = vperm.xlu0 %276, %v35
    %v278 = vpop.permute.xlu0 %277
    %v280 = vsel %vm275, %v278, 0.0
    %v281 = vadd.f32 %v274, %v280
    %vm282 = vcmp.eq.s32.totalorder %v266, 2
    %283 = vset.pattern.permute.xlu0 2
    %284 = vperm.xlu0 %283, %v35
    %v285 = vpop.permute.xlu0 %284
    %v287 = vsel %vm282, %v285, 0.0
    %v288 = vadd.f32 %v281, %v287
    %vm289 = vcmp.eq.s32.totalorder %v266, 3
    %290 = vset.pattern.permute.xlu0 3
    %291 = vperm.xlu0 %290, %v35
    %v292 = vpop.permute.xlu0 %291
    %v294 = vsel %vm289, %v292, 0.0
    %v295 = vadd.f32 %v288, %v294
    %vm296 = vcmp.eq.s32.totalorder %v266, 4
    %297 = vset.pattern.permute.xlu0 4
    %298 = vperm.xlu0 %297, %v35
    %v299 = vpop.permute.xlu0 %298
    %v301 = vsel %vm296, %v299, 0.0
    %v302 = vadd.f32 %v295, %v301
    %vm303 = vcmp.eq.s32.totalorder %v266, 5
    %304 = vset.pattern.permute.xlu0 5
    %305 = vperm.xlu0 %304, %v35
    %v306 = vpop.permute.xlu0 %305
    %v308 = vsel %vm303, %v306, 0.0
    %v309 = vadd.f32 %v302, %v308
    %vm310 = vcmp.eq.s32.totalorder %v266, 6
    %311 = vset.pattern.permute.xlu0 6
    %312 = vperm.xlu0 %311, %v35
    %v313 = vpop.permute.xlu0 %312
    %v315 = vsel %vm310, %v313, 0.0
    %v316 = vadd.f32 %v309, %v315
    %vm317 = vcmp.eq.s32.totalorder %v266, 7
    %318 = vset.pattern.permute.xlu0 7
    %319 = vperm.xlu0 %318, %v35
    %v320 = vpop.permute.xlu0 %319
    %v322 = vsel %vm317, %v320, 0.0
    %v323 = vadd.f32 %v316, %v322
    %vm324 = vcmp.eq.s32.totalorder %v266, 8
    %325 = vset.pattern.permute.xlu0 8
    %326 = vperm.xlu0 %325, %v35
    %v327 = vpop.permute.xlu0 %326
    %v329 = vsel %vm324, %v327, 0.0
    %v330 = vadd.f32 %v323, %v329
    %vm331 = vcmp.eq.s32.totalorder %v266, 9
    %332 = vset.pattern.permute.xlu0 9
    %333 = vperm.xlu0 %332, %v35
    %v334 = vpop.permute.xlu0 %333
    %v336 = vsel %vm331, %v334, 0.0
    %v337 = vadd.f32 %v330, %v336
    %vm338 = vcmp.eq.s32.totalorder %v266, 10
    %339 = vset.pattern.permute.xlu0 10
    %340 = vperm.xlu0 %339, %v35
    %v341 = vpop.permute.xlu0 %340
    %v343 = vsel %vm338, %v341, 0.0
    %v344 = vadd.f32 %v337, %v343
    %vm345 = vcmp.eq.s32.totalorder %v266, 11
    %346 = vset.pattern.permute.xlu0 11
    %347 = vperm.xlu0 %346, %v35
    %v348 = vpop.permute.xlu0 %347
    %v350 = vsel %vm345, %v348, 0.0
    %v351 = vadd.f32 %v344, %v350
    %vm352 = vcmp.eq.s32.totalorder %v266, 12
    %353 = vset.pattern.permute.xlu0 12
    %354 = vperm.xlu0 %353, %v35
    %v355 = vpop.permute.xlu0 %354
    %v357 = vsel %vm352, %v355, 0.0
    %v358 = vadd.f32 %v351, %v357
    %vm359 = vcmp.eq.s32.totalorder %v266, 13
    %360 = vset.pattern.permute.xlu0 13
    %361 = vperm.xlu0 %360, %v35
    %v362 = vpop.permute.xlu0 %361
    %v364 = vsel %vm359, %v362, 0.0
    %v365 = vadd.f32 %v358, %v364
    %vm366 = vcmp.eq.s32.totalorder %v266, 14
    %367 = vset.pattern.permute.xlu0 14
    %368 = vperm.xlu0 %367, %v35
    %v369 = vpop.permute.xlu0 %368
    %v371 = vsel %vm366, %v369, 0.0
    %v372 = vadd.f32 %v365, %v371
    %vm373 = vcmp.eq.s32.totalorder %v266, 15
    %374 = vset.pattern.permute.xlu0 15
    %375 = vperm.xlu0 %374, %v35
    %v376 = vpop.permute.xlu0 %375
    %v378 = vsel %vm373, %v376, 0.0
    %v379 = vadd.f32 %v372, %v378
    %v380 = vmul.f32 %v45, %v379
    %v381 = vsel %vm46, %v380, 0.0
    %382 = vadd.xlane.f32.xlu0 %v381
    %v383 = vpop.xlane.xlu0 %382
    %v384 = vsub.f32 %v58, %v383
    %v385 = vlaneseq
    %v386 = vshrl.u32 %v385, 7
    %s387 = smul.u32 0, 4
    %v388 = vstv %s387
    %v389 = vadd.s32 %v386, %v388
    %vm390 = vcmp.lt.s32.totalorder %v389, 4
    %v391 = vsel %vm390, %v384, 0.0
    %vm392 = vcmask 3072
    %393 = vst.msk [vmem:[%s2] sm:$0xf] %vm392, %v391
    // Predicated region
    $region18: #{tpu_custom_call.1} parent=1 // pred_check
      _
    $region19: #{tpu_custom_call.1} parent=1 // pred_check_branch
      %395 = sbr.rel (0) target = $region21
    $region20: #{tpu_custom_call.1} parent=1 // pred_region
      _
    $region21: #{tpu_custom_call.1} parent=1 // pred_fallthru
      _
    // Predicated region
    $region22: #{tpu_custom_call.1} parent=1 // pred_check
      _
    $region23: #{tpu_custom_call.1} parent=1 // pred_check_branch
      %397 = sbr.rel (0) target = $region25
    $region24: #{tpu_custom_call.1} parent=1 // pred_region
      _
    $region25: #{tpu_custom_call.1} parent=1 // pred_fallthru
      _
    %398 = vsyncpa [#allocation3], 1
    %399 = vsyncpa [#allocation5], 1

</llo_original>
